<compile_context>
chip_gen: v7x
topology: tpu7x:2x2x1
jax: 0.10.0
libtpu: 0.0.40
codegen_flags: <defaults>
</compile_context>

<pallas_src>
import functools

import jax
import jax.numpy as jnp
from jax import lax
from jax.experimental import pallas as pl
from jax.experimental.pallas import tpu as pltpu

KH = KW = 3      # Conv2d kernel_size=3, stride=1, padding=1
N_COORD = 3      # xx, yy, rr  (with_r=True, with_boundary=False)


def coordconv_kernel(x_ref, w_ref, b_ref, o_ref, *, W):
    # x_ref: (B, C8, L)        row-padded, flattened (row stride = W) input per batch:
    #                          [W+1 zeros][H*W image][zero tail]; L is 128-lane aligned.
    # w_ref: (Cout, KH*KW*C8)  im2col-ordered conv weights (K = 72).
    # b_ref: (Cout, 1)         bias.
    # o_ref: (B, Cout, H*W)    lane-dense output (H*W = 256 here, unmasked stores).
    B, C8 = x_ref.shape[0], x_ref.shape[1]
    HW = o_ref.shape[2]
    dt = o_ref.dtype

    # 0/1 column masks for taps that read across a row boundary:
    #   dw == 0    reads col w-1 -> invalid at w == 0
    #   dw == KW-1 reads col w+1 -> invalid at w == W-1
    # Hoisted: built once, reused for every tap / batch element.
    col = lax.broadcasted_iota(jnp.int32, (1, HW), 1) % W
    keep_l = jnp.broadcast_to((col != 0).astype(dt), (C8, HW))
    keep_r = jnp.broadcast_to((col != W - 1).astype(dt), (C8, HW))

    # im2col: each of the KH*KW taps is a STATIC lane-shifted slice of the flattened
    # image; per-batch patch matrices are placed side by side along lanes (HW is a
    # multiple of 128 so the concat is vreg-aligned) and the whole conv collapses to
    # ONE MXU matmul over N = B*HW columns.
    per_batch = []
    for b in range(B):
        x = x_ref[b]                                     # (C8, L), one load per batch
        taps = []
        for dh in range(KH):
            for dw in range(KW):
                off = dh * W + dw
                t = x[:, off:off + HW]                   # (C8, HW)
                if dw == 0:
                    t = t * keep_l
                elif dw == KW - 1:
                    t = t * keep_r
                taps.append(t)
        per_batch.append(jnp.concatenate(taps, axis=0))  # (KH*KW*C8, HW)
    patches = jnp.concatenate(per_batch, axis=1)         # (KH*KW*C8, B*HW)

    acc = jnp.dot(w_ref[...], patches,
                  preferred_element_type=jnp.float32)    # (Cout, B*HW) on the MXU
    acc = acc + b_ref[...].astype(jnp.float32)           # bias added once
    for b in range(B):
        o_ref[b] = acc[:, b * HW:(b + 1) * HW].astype(dt)   # 256-aligned, unmasked stores


@jax.jit
def coordconv_pallas(x_nchw, w_oihw, b):
    """x_nchw: (B, Cin, H, W); w_oihw: (Cout, Cin+3, 3, 3); b: (Cout,) -> (B, Cout, H, W)."""
    B, Cin, H, W = x_nchw.shape
    Cout = w_oihw.shape[0]
    assert w_oihw.shape == (Cout, Cin + N_COORD, KH, KW)
    assert H > 1 and W > 1, "coord channels divide by (H-1)/(W-1)"

    dt = x_nchw.dtype
    HW = H * W
    C_aug = Cin + N_COORD
    C8 = (C_aug + 7) // 8 * 8                         # pad channels 7 -> 8: one sublane tile per tap
    front = W + 1                                     # one padded row + one halo element
    L = (front + HW + W + 1 + 127) // 128 * 128       # flattened length, lane-aligned

    # --- coordinate channels, built once (batch-invariant), cast like type_as ---
    ii = jnp.arange(H, dtype=jnp.float32)
    jj = jnp.arange(W, dtype=jnp.float32)
    xx = jnp.broadcast_to((ii / (H - 1) * 2.0 - 1.0)[:, None], (H, W))  # varies along x_dim (H)
    yy = jnp.broadcast_to((jj / (W - 1) * 2.0 - 1.0)[None, :], (H, W))  # varies along y_dim (W)
    rr = jnp.sqrt((xx - 0.5) ** 2 + (yy - 0.5) ** 2)
    coords = jnp.stack([xx, yy, rr], axis=0).astype(dt)                 # (3, H, W)

    # --- kernel input: ONE concat + ONE pad (reshape is metadata-only) ----------
    aug = jnp.concatenate(
        [x_nchw, jnp.broadcast_to(coords[None], (B, N_COORD, H, W))], axis=1)  # (B, 7, H, W)
    flat = aug.reshape(B, C_aug, HW)
    x_in = jnp.pad(flat, ((0, 0), (0, C8 - C_aug), (front, L - HW - front)))   # (B, C8, L)

    # --- im2col weights: (Cout, KH*KW*C8), K index = (dh*KW + dw)*C8 + c --------
    w_padc = jnp.pad(w_oihw, ((0, 0), (0, C8 - C_aug), (0, 0), (0, 0)))
    w2 = jnp.transpose(w_padc, (0, 2, 3, 1)).reshape(Cout, KH * KW * C8)
    b2 = b.reshape(Cout, 1)

    kernel = functools.partial(coordconv_kernel, W=W)
    flops = 2 * Cout * (KH * KW * C8) * (B * HW)
    itemsize = jnp.dtype(dt).itemsize
    bytes_accessed = (B * C8 * L + Cout * KH * KW * C8 + Cout + B * Cout * HW) * itemsize

    out = pl.pallas_call(
        kernel,
        out_shape=jax.ShapeDtypeStruct((B, Cout, HW), dt),
        grid_spec=pltpu.PrefetchScalarGridSpec(
            num_scalar_prefetch=0,
            grid=(1,),                                # whole problem in one step (<0.5 MiB in VMEM)
            in_specs=[
                pl.BlockSpec((B, C8, L), lambda i: (0, 0, 0)),
                pl.BlockSpec((Cout, KH * KW * C8), lambda i: (0, 0)),
                pl.BlockSpec((Cout, 1), lambda i: (0, 0)),
            ],
            out_specs=pl.BlockSpec((B, Cout, HW), lambda i: (0, 0, 0)),
        ),
        compiler_params=pltpu.CompilerParams(dimension_semantics=("arbitrary",)),
        cost_estimate=pl.CostEstimate(flops=flops, transcendentals=0,
                                      bytes_accessed=bytes_accessed),
    )(x_in, w2, b2)

    return out.reshape(B, Cout, H, W)                 # metadata-only, no slice / copy


def coordconv_ref(x_nchw, w_oihw, b):
    """Plain-JAX reference mirroring PyTorch AddCoords(with_r=True) + Conv2d."""
    B, C, H, W = x_nchw.shape
    i = jnp.arange(H, dtype=jnp.float32)
    j = jnp.arange(W, dtype=jnp.float32)
    xx = jnp.broadcast_to((i / (H - 1) * 2.0 - 1.0)[:, None], (H, W))
    yy = jnp.broadcast_to((j / (W - 1) * 2.0 - 1.0)[None, :], (H, W))
    rr = jnp.sqrt((xx - 0.5) ** 2 + (yy - 0.5) ** 2)
    coords = jnp.broadcast_to(jnp.stack([xx, yy, rr], 0)[None], (B, 3, H, W))
    ret = jnp.concatenate([x_nchw, coords.astype(x_nchw.dtype)], axis=1)
    out = lax.conv_general_dilated(
        ret, w_oihw, window_strides=(1, 1), padding=((1, 1), (1, 1)),
        dimension_numbers=("NCHW", "OIHW", "NCHW"),
        precision=lax.Precision.HIGHEST)
    return out + b[None, :, None, None]


if __name__ == "__main__":
    B, Cin, H, W = 2, 4, 16, 16
    Cout = 8

    key = jax.random.PRNGKey(0)
    kx, kw, kb = jax.random.split(key, 3)
    x = jax.random.normal(kx, (B, Cin, H, W), dtype=jnp.float32)

    # Deterministic Conv2d(in=Cin+3, out=Cout, kernel_size=3, padding=1) params
    # (uniform init mimicking PyTorch's default fan-in bound; synthetic).
    fan_in = (Cin + N_COORD) * KH * KW
    bound = 1.0 / (fan_in ** 0.5)
    w = jax.random.uniform(kw, (Cout, Cin + N_COORD, KH, KW), minval=-bound,
                           maxval=bound, dtype=jnp.float32)
    bias = jax.random.uniform(kb, (Cout,), minval=-bound, maxval=bound,
                              dtype=jnp.float32)

    out = jax.block_until_ready(coordconv_pallas(x, w, bias))
    ref = jax.block_until_ready(coordconv_ref(x, w, bias))

    assert out.shape == (B, Cout, H, W), out.shape
    max_err = float(jnp.max(jnp.abs(out - ref)))
    assert max_err < 2e-2, f"max abs err {max_err}"
    print("KERNEL_OK")
</pallas_src>

<mosaic_0001>
module attributes {stable_mosaic.version = 11 : i64} {
  func.func @coordconv_kernel(%arg0: i32, %arg1: memref<2x8x384xf32, #tpu.memory_space<vmem>>, %arg2: memref<8x72xf32, #tpu.memory_space<vmem>>, %arg3: memref<8x1xf32, #tpu.memory_space<vmem>>, %arg4: memref<2x8x256xf32, #tpu.memory_space<vmem>>) attributes {dimension_semantics = [#tpu.dimension_semantics<arbitrary>], iteration_bounds = array<i64: 1>, scalar_prefetch = 0 : i64, scratch_operands = 0 : i64, tpu.core_type = #tpu.core_type<tc>, window_params = [{pipeline_mode = #tpu.pipeline_mode<synchronous>, transform_indices = @transform_0, window_bounds = array<i64: 2, 8, 384>}, {pipeline_mode = #tpu.pipeline_mode<synchronous>, transform_indices = @transform_1, window_bounds = array<i64: 8, 72>}, {pipeline_mode = #tpu.pipeline_mode<synchronous>, transform_indices = @transform_2, window_bounds = array<i64: 8, 1>}, {pipeline_mode = #tpu.pipeline_mode<synchronous>, transform_indices = @transform_3, window_bounds = array<i64: 2, 8, 256>}]} {
    %0 = tpu.iota {dimensions = array<i32: 1>} : vector<1x256xi32>
    %c16_i32 = arith.constant 16 : i32
    %c0_i32 = arith.constant 0 : i32
    %1 = arith.cmpi eq, %c16_i32, %c0_i32 : i32
    %c1_i32 = arith.constant 1 : i32
    %2 = arith.select %1, %c1_i32, %c16_i32 : i32
    %3 = vector.broadcast %2 : i32 to vector<1x256xi32>
    %4 = arith.remsi %0, %3 : vector<1x256xi32>
    %c0_i32_0 = arith.constant 0 : i32
    %5 = vector.broadcast %c0_i32_0 : i32 to vector<1x256xi32>
    %6 = arith.cmpi ne, %4, %5 : vector<1x256xi32>
    %c0_i32_1 = arith.constant 0 : i32
    %7 = vector.broadcast %c0_i32_1 : i32 to vector<1x256xi32>
    %8 = arith.cmpi slt, %4, %7 : vector<1x256xi32>
    %c0_i32_2 = arith.constant 0 : i32
    %9 = arith.cmpi slt, %2, %c0_i32_2 : i32
    %10 = vector.broadcast %9 : i1 to vector<1x256xi1>
    %11 = vector.broadcast %10 : vector<1x256xi1> to vector<1x256xi1>
    %12 = arith.xori %8, %11 : vector<1x256xi1>
    %13 = arith.andi %12, %6 : vector<1x256xi1>
    %14 = vector.broadcast %2 : i32 to vector<1x256xi32>
    %15 = arith.addi %4, %14 : vector<1x256xi32>
    %16 = arith.select %13, %15, %4 : vector<1x256xi1>, vector<1x256xi32>
    %c0_i32_3 = arith.constant 0 : i32
    %17 = vector.broadcast %c0_i32_3 : i32 to vector<1x256xi32>
    %18 = arith.cmpi ne, %16, %17 : vector<1x256xi32>
    %19 = arith.extui %18 : vector<1x256xi1> to vector<1x256xi32>
    %20 = arith.sitofp %19 : vector<1x256xi32> to vector<1x256xf32>
    %21 = vector.shape_cast %20 : vector<1x256xf32> to vector<1x256xf32>
    %22 = vector.broadcast %21 : vector<1x256xf32> to vector<8x256xf32>
    %c15_i32 = arith.constant 15 : i32
    %23 = vector.broadcast %c15_i32 : i32 to vector<1x256xi32>
    %24 = arith.cmpi ne, %16, %23 : vector<1x256xi32>
    %25 = arith.extui %24 : vector<1x256xi1> to vector<1x256xi32>
    %26 = arith.sitofp %25 : vector<1x256xi32> to vector<1x256xf32>
    %27 = vector.shape_cast %26 : vector<1x256xf32> to vector<1x256xf32>
    %28 = vector.broadcast %27 : vector<1x256xf32> to vector<8x256xf32>
    %c0 = arith.constant 0 : index
    %c0_4 = arith.constant 0 : index
    %c0_5 = arith.constant 0 : index
    %29 = vector.load %arg1[%c0, %c0_4, %c0_5] : memref<2x8x384xf32, #tpu.memory_space<vmem>>, vector<1x8x384xf32>
    %30 = vector.shape_cast %29 : vector<1x8x384xf32> to vector<8x384xf32>
    %31 = vector.extract_strided_slice %30 {offsets = [0, 0], sizes = [8, 256], strides = [1, 1]} : vector<8x384xf32> to vector<8x256xf32>
    %32 = arith.mulf %31, %22 : vector<8x256xf32>
    %33 = vector.extract_strided_slice %30 {offsets = [0, 1], sizes = [8, 256], strides = [1, 1]} : vector<8x384xf32> to vector<8x256xf32>
    %34 = vector.extract_strided_slice %30 {offsets = [0, 2], sizes = [8, 256], strides = [1, 1]} : vector<8x384xf32> to vector<8x256xf32>
    %35 = arith.mulf %34, %28 : vector<8x256xf32>
    %36 = vector.extract_strided_slice %30 {offsets = [0, 16], sizes = [8, 256], strides = [1, 1]} : vector<8x384xf32> to vector<8x256xf32>
    %37 = arith.mulf %36, %22 : vector<8x256xf32>
    %38 = vector.extract_strided_slice %30 {offsets = [0, 17], sizes = [8, 256], strides = [1, 1]} : vector<8x384xf32> to vector<8x256xf32>
    %39 = vector.extract_strided_slice %30 {offsets = [0, 18], sizes = [8, 256], strides = [1, 1]} : vector<8x384xf32> to vector<8x256xf32>
    %40 = arith.mulf %39, %28 : vector<8x256xf32>
    %41 = vector.extract_strided_slice %30 {offsets = [0, 32], sizes = [8, 256], strides = [1, 1]} : vector<8x384xf32> to vector<8x256xf32>
    %42 = arith.mulf %41, %22 : vector<8x256xf32>
    %43 = vector.extract_strided_slice %30 {offsets = [0, 33], sizes = [8, 256], strides = [1, 1]} : vector<8x384xf32> to vector<8x256xf32>
    %44 = vector.extract_strided_slice %30 {offsets = [0, 34], sizes = [8, 256], strides = [1, 1]} : vector<8x384xf32> to vector<8x256xf32>
    %45 = arith.mulf %44, %28 : vector<8x256xf32>
    %46 = tpu.concatenate %32, %33, %35, %37, %38, %40, %42, %43, %45 in 0 : vector<8x256xf32>, vector<8x256xf32>, vector<8x256xf32>, vector<8x256xf32>, vector<8x256xf32>, vector<8x256xf32>, vector<8x256xf32>, vector<8x256xf32>, vector<8x256xf32> -> vector<72x256xf32>
    %c1 = arith.constant 1 : index
    %c0_6 = arith.constant 0 : index
    %c0_7 = arith.constant 0 : index
    %47 = vector.load %arg1[%c1, %c0_6, %c0_7] : memref<2x8x384xf32, #tpu.memory_space<vmem>>, vector<1x8x384xf32>
    %48 = vector.shape_cast %47 : vector<1x8x384xf32> to vector<8x384xf32>
    %49 = vector.extract_strided_slice %48 {offsets = [0, 0], sizes = [8, 256], strides = [1, 1]} : vector<8x384xf32> to vector<8x256xf32>
    %50 = arith.mulf %49, %22 : vector<8x256xf32>
    %51 = vector.extract_strided_slice %48 {offsets = [0, 1], sizes = [8, 256], strides = [1, 1]} : vector<8x384xf32> to vector<8x256xf32>
    %52 = vector.extract_strided_slice %48 {offsets = [0, 2], sizes = [8, 256], strides = [1, 1]} : vector<8x384xf32> to vector<8x256xf32>
    %53 = arith.mulf %52, %28 : vector<8x256xf32>
    %54 = vector.extract_strided_slice %48 {offsets = [0, 16], sizes = [8, 256], strides = [1, 1]} : vector<8x384xf32> to vector<8x256xf32>
    %55 = arith.mulf %54, %22 : vector<8x256xf32>
    %56 = vector.extract_strided_slice %48 {offsets = [0, 17], sizes = [8, 256], strides = [1, 1]} : vector<8x384xf32> to vector<8x256xf32>
    %57 = vector.extract_strided_slice %48 {offsets = [0, 18], sizes = [8, 256], strides = [1, 1]} : vector<8x384xf32> to vector<8x256xf32>
    %58 = arith.mulf %57, %28 : vector<8x256xf32>
    %59 = vector.extract_strided_slice %48 {offsets = [0, 32], sizes = [8, 256], strides = [1, 1]} : vector<8x384xf32> to vector<8x256xf32>
    %60 = arith.mulf %59, %22 : vector<8x256xf32>
    %61 = vector.extract_strided_slice %48 {offsets = [0, 33], sizes = [8, 256], strides = [1, 1]} : vector<8x384xf32> to vector<8x256xf32>
    %62 = vector.extract_strided_slice %48 {offsets = [0, 34], sizes = [8, 256], strides = [1, 1]} : vector<8x384xf32> to vector<8x256xf32>
    %63 = arith.mulf %62, %28 : vector<8x256xf32>
    %64 = tpu.concatenate %50, %51, %53, %55, %56, %58, %60, %61, %63 in 0 : vector<8x256xf32>, vector<8x256xf32>, vector<8x256xf32>, vector<8x256xf32>, vector<8x256xf32>, vector<8x256xf32>, vector<8x256xf32>, vector<8x256xf32>, vector<8x256xf32> -> vector<72x256xf32>
    %65 = tpu.concatenate %46, %64 in 1 : vector<72x256xf32>, vector<72x256xf32> -> vector<72x512xf32>
    %c0_8 = arith.constant 0 : index
    %c0_9 = arith.constant 0 : index
    %66 = vector.load %arg2[%c0_8, %c0_9] : memref<8x72xf32, #tpu.memory_space<vmem>>, vector<8x72xf32>
    %cst = arith.constant dense<0.000000e+00> : vector<8x512xf32>
    %67 = tpu.matmul %66, %65, %cst {dimension_numbers = #tpu.dot_dimension_numbers<[1], [0], [0], [1], [0, 0, 1, 1], [], []>} : vector<8x72xf32>, vector<72x512xf32>, vector<8x512xf32> -> vector<8x512xf32>
    %c0_10 = arith.constant 0 : index
    %c0_11 = arith.constant 0 : index
    %68 = vector.load %arg3[%c0_10, %c0_11] : memref<8x1xf32, #tpu.memory_space<vmem>>, vector<8x1xf32>
    %69 = vector.broadcast %68 : vector<8x1xf32> to vector<8x512xf32>
    %70 = arith.addf %67, %69 : vector<8x512xf32>
    %71 = vector.extract_strided_slice %70 {offsets = [0, 0], sizes = [8, 256], strides = [1, 1]} : vector<8x512xf32> to vector<8x256xf32>
    %c0_12 = arith.constant 0 : index
    %c0_13 = arith.constant 0 : index
    %c0_14 = arith.constant 0 : index
    %72 = vector.load %arg4[%c0_12, %c0_13, %c0_14] : memref<2x8x256xf32, #tpu.memory_space<vmem>>, vector<1x8x256xf32>
    %73 = vector.shape_cast %72 : vector<1x8x256xf32> to vector<8x256xf32>
    %74 = vector.shape_cast %71 : vector<8x256xf32> to vector<1x8x256xf32>
    tpu.vector_store %arg4[%c0_12, %c0_13, %c0_14], %74 {strides = array<i32>} : memref<2x8x256xf32, #tpu.memory_space<vmem>>, vector<1x8x256xf32>,
    %75 = vector.extract_strided_slice %70 {offsets = [0, 256], sizes = [8, 256], strides = [1, 1]} : vector<8x512xf32> to vector<8x256xf32>
    %c1_15 = arith.constant 1 : index
    %c0_16 = arith.constant 0 : index
    %c0_17 = arith.constant 0 : index
    %76 = vector.load %arg4[%c1_15, %c0_16, %c0_17] : memref<2x8x256xf32, #tpu.memory_space<vmem>>, vector<1x8x256xf32>
    %77 = vector.shape_cast %76 : vector<1x8x256xf32> to vector<8x256xf32>
    %78 = vector.shape_cast %75 : vector<8x256xf32> to vector<1x8x256xf32>
    tpu.vector_store %arg4[%c1_15, %c0_16, %c0_17], %78 {strides = array<i32>} : memref<2x8x256xf32, #tpu.memory_space<vmem>>, vector<1x8x256xf32>,
    return
  }
  func.func @transform_0(%arg0: i32) -> (i32, i32, i32) {
    %c0_i32 = arith.constant 0 : i32
    %c0_i32_0 = arith.constant 0 : i32
    %c0_i32_1 = arith.constant 0 : i32
    %c0_i32_2 = arith.constant 0 : i32
    return %c0_i32, %c0_i32_0, %c0_i32_1 : i32, i32, i32
  }
  func.func @transform_1(%arg0: i32) -> (i32, i32) {
    %c0_i32 = arith.constant 0 : i32
    %c0_i32_0 = arith.constant 0 : i32
    %c0_i32_1 = arith.constant 0 : i32
    return %c0_i32, %c0_i32_0 : i32, i32
  }
  func.func @transform_2(%arg0: i32) -> (i32, i32) {
    %c0_i32 = arith.constant 0 : i32
    %c0_i32_0 = arith.constant 0 : i32
    %c0_i32_1 = arith.constant 0 : i32
    return %c0_i32, %c0_i32_0 : i32, i32
  }
  func.func @transform_3(%arg0: i32) -> (i32, i32, i32) {
    %c0_i32 = arith.constant 0 : i32
    %c0_i32_0 = arith.constant 0 : i32
    %c0_i32_1 = arith.constant 0 : i32
    %c0_i32_2 = arith.constant 0 : i32
    return %c0_i32, %c0_i32_0, %c0_i32_1 : i32, i32, i32
  }
}

</mosaic_0001>

<llo_original>
// kernel: coordconv_pallas.1
$region0: #{coordconv_pallas.1}
  #allocation0 [shape = 'u32[]', space=smem, size = 0x4, offset = 0x4, fixed_abs, tag = 'smem constant byte address 0x4 - core index']
  #allocation1 [shape = 'u32[144,128]{1,0:T(1,128)}', space=vmem, size = 0x12000, scoped, tag = 'internal scratch']
  %s0 = inlined_call_operand.vmem [shape: f32[2,8,384], index: 0, kind: input, shape index: {}]
  %s1 = inlined_call_operand.vmem [shape: f32[8,72], index: 1, kind: input, shape index: {}]
  %s2 = inlined_call_operand.vmem [shape: f32[8,1], index: 2, kind: input, shape index: {}]
  %s3 = inlined_call_operand.vmem [shape: f32[2,8,256], index: 3, kind: output, shape index: {}]
  %s4 = sld [smem:[#allocation0]]
  $region22: #{coordconv_pallas.1} parent=0
    _
  %s6 = ssub.s32 1, %s4
  %s7 = scalar_select 0, %s6, %s4
  // Predicated region
  $region2: #{coordconv_pallas.1} parent=0 // pred_check
    _
  $region3: #{coordconv_pallas.1} parent=0 // pred_check_branch
    %9 = sbr.rel (0) target = $region5
  $region4: #{coordconv_pallas.1} parent=0 // pred_region
    _
  $region5: #{coordconv_pallas.1} parent=0 // pred_fallthru
    _
  // Predicated region
  $region6: #{coordconv_pallas.1} parent=0 // pred_check
    _
  $region7: #{coordconv_pallas.1} parent=0 // pred_check_branch
    %11 = sbr.rel (0) target = $region9
  $region8: #{coordconv_pallas.1} parent=0 // pred_region
    _
  $region9: #{coordconv_pallas.1} parent=0 // pred_fallthru
    _
  // Predicated region
  $region10: #{coordconv_pallas.1} parent=0 // pred_check
    _
  $region11: #{coordconv_pallas.1} parent=0 // pred_check_branch
    %13 = sbr.rel (0) target = $region13
  $region12: #{coordconv_pallas.1} parent=0 // pred_region
    _
  $region13: #{coordconv_pallas.1} parent=0 // pred_fallthru
    _
  %v14 = vlaneseq
  %v15 = vand.u32 %v14, 127
  %v16 = vadd.s32 %v15, 128
  %vm17 = vcmp.lt.s32.totalorder %v15, 0
  %v18 = vsub.s32 0, %v15
  %v19 = vsel %vm17, %v18, %v15
  %v20 = vshrl.u32 %v19, 4
  %v21 = vand.u32 %v19, 15
  %v22 = vsub.s32 0, %v21
  %v23 = vsel %vm17, %v22, %v21
  %vm24 = vcmp.lt.s32.totalorder %v16, 0
  %v25 = vsub.s32 0, %v16
  %v26 = vsel %vm24, %v25, %v16
  %v27 = vshrl.u32 %v26, 4
  %v28 = vand.u32 %v26, 15
  %v29 = vsub.s32 0, %v28
  %v30 = vsel %vm24, %v29, %v28
  %vm31 = vcmp.ne.s32.totalorder %v23, 0
  %vm32 = vcmp.ne.s32.totalorder %v30, 0
  %vm33 = vcmp.lt.s32.totalorder %v23, 0
  %vm34 = vcmp.lt.s32.totalorder %v30, 0
  %vm35 = vmand %vm33, %vm31
  %vm36 = vmand %vm34, %vm32
  %v37 = vadd.s32 %v23, 16
  %v38 = vadd.s32 %v30, 16
  %v39 = vsel %vm35, %v37, %v23
  %v40 = vsel %vm36, %v38, %v30
  %vm41 = vcmp.ne.s32.totalorder %v39, 0
  %vm42 = vcmp.ne.s32.totalorder %v40, 0
  %v43 = vsel %vm41, 1, 0
  %v44 = vsel %vm42, 1, 0
  %v45 = vcvt.s32.f32 %v43
  %v46 = vcvt.s32.f32 %v44
  %vm47 = vcmp.ne.s32.totalorder %v39, 15
  %vm48 = vcmp.ne.s32.totalorder %v40, 15
  %v49 = vsel %vm47, 1, 0
  %v50 = vsel %vm48, 1, 0
  %v51 = vcvt.s32.f32 %v49
  %v52 = vcvt.s32.f32 %v50
  %v53 = vld [vmem:[%s0] sm:$0xff]
  %v54 = vld [vmem:[%s0 + $0x8] sm:$0xff]
  %v55 = vld [vmem:[%s0 + $0x10] sm:$0xff]
  %v56 = vmul.f32 %v53, %v45
  %v57 = vmul.f32 %v54, %v46
  %60 = vrot.lane.b32.xlu0 %v51, 2
  %v61 = vpop.permute.xlu0 %60
  %62 = vrot.lane.b32.xlu0 %v52, 2
  %v63 = vpop.permute.xlu0 %62
  %vm64 = vcmask 15360
  %v65 = vsel %vm64, %v61, %v63
  %v69 = vmul.f32 %v53, %v61
  %v70 = vmul.f32 %v54, %v65
  %v71 = vmul.f32 %v55, %v63
  %74 = vrot.lane.b32.xlu0 %v45, 16
  %v75 = vpop.permute.xlu0 %74
  %76 = vrot.lane.b32.xlu0 %v46, 16
  %v77 = vpop.permute.xlu0 %76
  %vm78 = vcmask 130048
  %v79 = vsel %vm78, %v75, %v77
  %v83 = vmul.f32 %v53, %v75
  %v84 = vmul.f32 %v54, %v79
  %v85 = vmul.f32 %v55, %v77
  %86 = vrot.lane.b32.xlu0 %v51, 18
  %v87 = vpop.permute.xlu0 %86
  %88 = vrot.lane.b32.xlu0 %v52, 18
  %v89 = vpop.permute.xlu0 %88
  %vm90 = vcmask 146432
  %v91 = vsel %vm90, %v87, %v89
  %v95 = vmul.f32 %v53, %v87
  %v96 = vmul.f32 %v54, %v91
  %v97 = vmul.f32 %v55, %v89
  %98 = vrot.lane.b32.xlu0 %v45, 32
  %v99 = vpop.permute.xlu0 %98
  %100 = vrot.lane.b32.xlu0 %v46, 32
  %v101 = vpop.permute.xlu0 %100
  %vm102 = vcmask 261120
  %v103 = vsel %vm102, %v99, %v101
  %v107 = vmul.f32 %v53, %v99
  %v108 = vmul.f32 %v54, %v103
  %v109 = vmul.f32 %v55, %v101
  %110 = vrot.lane.b32.xlu0 %v51, 34
  %v111 = vpop.permute.xlu0 %110
  %112 = vrot.lane.b32.xlu0 %v52, 34
  %v113 = vpop.permute.xlu0 %112
  %vm114 = vcmask 277504
  %v115 = vsel %vm114, %v111, %v113
  %v119 = vmul.f32 %v53, %v111
  %v120 = vmul.f32 %v54, %v115
  %v121 = vmul.f32 %v55, %v113
  %125 = vrot.lane.b32.xlu0 %v53, 127
  %v126 = vpop.permute.xlu0 %125
  %127 = vrot.lane.b32.xlu0 %v54, 127
  %v128 = vpop.permute.xlu0 %127
  %129 = vrot.lane.b32.xlu0 %v55, 127
  %v130 = vpop.permute.xlu0 %129
  %vm131 = vcmask 1039360
  %v132 = vsel %vm131, %v126, %v128
  %v133 = vsel %vm131, %v128, %v130
  %139 = vrot.lane.b32.xlu0 %v69, 126
  %v140 = vpop.permute.xlu0 %139
  %141 = vrot.lane.b32.xlu0 %v70, 126
  %v142 = vpop.permute.xlu0 %141
  %143 = vrot.lane.b32.xlu0 %v71, 126
  %v144 = vpop.permute.xlu0 %143
  %vm145 = vcmask 1031168
  %v146 = vsel %vm145, %v140, %v142
  %v147 = vsel %vm145, %v142, %v144
  %153 = vrot.lane.b32.xlu0 %v83, 112
  %v154 = vpop.permute.xlu0 %153
  %155 = vrot.lane.b32.xlu0 %v84, 112
  %v156 = vpop.permute.xlu0 %155
  %157 = vrot.lane.b32.xlu0 %v85, 112
  %v158 = vpop.permute.xlu0 %157
  %vm159 = vcmask 916480
  %v160 = vsel %vm159, %v154, %v156
  %v161 = vsel %vm159, %v156, %v158
  %164 = vrot.lane.b32.xlu0 %v53, 111
  %v165 = vpop.permute.xlu0 %164
  %166 = vrot.lane.b32.xlu0 %v54, 111
  %v167 = vpop.permute.xlu0 %166
  %168 = vrot.lane.b32.xlu0 %v55, 111
  %v169 = vpop.permute.xlu0 %168
  %vm170 = vcmask 908288
  %v171 = vsel %vm170, %v165, %v167
  %v172 = vsel %vm170, %v167, %v169
  %178 = vrot.lane.b32.xlu0 %v95, 110
  %v179 = vpop.permute.xlu0 %178
  %180 = vrot.lane.b32.xlu0 %v96, 110
  %v181 = vpop.permute.xlu0 %180
  %182 = vrot.lane.b32.xlu0 %v97, 110
  %v183 = vpop.permute.xlu0 %182
  %vm184 = vcmask 900096
  %v185 = vsel %vm184, %v179, %v181
  %v186 = vsel %vm184, %v181, %v183
  %192 = vrot.lane.b32.xlu0 %v107, 96
  %v193 = vpop.permute.xlu0 %192
  %194 = vrot.lane.b32.xlu0 %v108, 96
  %v195 = vpop.permute.xlu0 %194
  %196 = vrot.lane.b32.xlu0 %v109, 96
  %v197 = vpop.permute.xlu0 %196
  %vm198 = vcmask 785408
  %v199 = vsel %vm198, %v193, %v195
  %v200 = vsel %vm198, %v195, %v197
  %203 = vrot.lane.b32.xlu0 %v53, 95
  %v204 = vpop.permute.xlu0 %203
  %205 = vrot.lane.b32.xlu0 %v54, 95
  %v206 = vpop.permute.xlu0 %205
  %207 = vrot.lane.b32.xlu0 %v55, 95
  %v208 = vpop.permute.xlu0 %207
  %vm209 = vcmask 777216
  %v210 = vsel %vm209, %v204, %v206
  %v211 = vsel %vm209, %v206, %v208
  %217 = vrot.lane.b32.xlu0 %v119, 94
  %v218 = vpop.permute.xlu0 %217
  %219 = vrot.lane.b32.xlu0 %v120, 94
  %v220 = vpop.permute.xlu0 %219
  %221 = vrot.lane.b32.xlu0 %v121, 94
  %v222 = vpop.permute.xlu0 %221
  %vm223 = vcmask 769024
  %v224 = vsel %vm223, %v218, %v220
  %v225 = vsel %vm223, %v220, %v222
  %s228 = scalar_lea.vmem %s0, 24
  %v229 = vld [vmem:[%s228] sm:$0xff]
  %v230 = vld [vmem:[%s228 + $0x8] sm:$0xff]
  %v231 = vld [vmem:[%s228 + $0x10] sm:$0xff]
  %v232 = vmul.f32 %v229, %v45
  %v233 = vmul.f32 %v230, %v46
  %v234 = vmul.f32 %v229, %v61
  %v235 = vmul.f32 %v230, %v65
  %v236 = vmul.f32 %v231, %v63
  %v237 = vmul.f32 %v229, %v75
  %v238 = vmul.f32 %v230, %v79
  %v239 = vmul.f32 %v231, %v77
  %v240 = vmul.f32 %v229, %v87
  %v241 = vmul.f32 %v230, %v91
  %v242 = vmul.f32 %v231, %v89
  %v243 = vmul.f32 %v229, %v99
  %v244 = vmul.f32 %v230, %v103
  %v245 = vmul.f32 %v231, %v101
  %v246 = vmul.f32 %v229, %v111
  %v247 = vmul.f32 %v230, %v115
  %v248 = vmul.f32 %v231, %v113
  %252 = vrot.lane.b32.xlu0 %v229, 127
  %v253 = vpop.permute.xlu0 %252
  %254 = vrot.lane.b32.xlu0 %v230, 127
  %v255 = vpop.permute.xlu0 %254
  %256 = vrot.lane.b32.xlu0 %v231, 127
  %v257 = vpop.permute.xlu0 %256
  %v258 = vsel %vm131, %v253, %v255
  %v259 = vsel %vm131, %v255, %v257
  %265 = vrot.lane.b32.xlu0 %v234, 126
  %v266 = vpop.permute.xlu0 %265
  %267 = vrot.lane.b32.xlu0 %v235, 126
  %v268 = vpop.permute.xlu0 %267
  %269 = vrot.lane.b32.xlu0 %v236, 126
  %v270 = vpop.permute.xlu0 %269
  %v271 = vsel %vm145, %v266, %v268
  %v272 = vsel %vm145, %v268, %v270
  %278 = vrot.lane.b32.xlu0 %v237, 112
  %v279 = vpop.permute.xlu0 %278
  %280 = vrot.lane.b32.xlu0 %v238, 112
  %v281 = vpop.permute.xlu0 %280
  %282 = vrot.lane.b32.xlu0 %v239, 112
  %v283 = vpop.permute.xlu0 %282
  %v284 = vsel %vm159, %v279, %v281
  %v285 = vsel %vm159, %v281, %v283
  %288 = vrot.lane.b32.xlu0 %v229, 111
  %v289 = vpop.permute.xlu0 %288
  %290 = vrot.lane.b32.xlu0 %v230, 111
  %v291 = vpop.permute.xlu0 %290
  %292 = vrot.lane.b32.xlu0 %v231, 111
  %v293 = vpop.permute.xlu0 %292
  %v294 = vsel %vm170, %v289, %v291
  %v295 = vsel %vm170, %v291, %v293
  %301 = vrot.lane.b32.xlu0 %v240, 110
  %v302 = vpop.permute.xlu0 %301
  %303 = vrot.lane.b32.xlu0 %v241, 110
  %v304 = vpop.permute.xlu0 %303
  %305 = vrot.lane.b32.xlu0 %v242, 110
  %v306 = vpop.permute.xlu0 %305
  %v307 = vsel %vm184, %v302, %v304
  %v308 = vsel %vm184, %v304, %v306
  %314 = vrot.lane.b32.xlu0 %v243, 96
  %v315 = vpop.permute.xlu0 %314
  %316 = vrot.lane.b32.xlu0 %v244, 96
  %v317 = vpop.permute.xlu0 %316
  %318 = vrot.lane.b32.xlu0 %v245, 96
  %v319 = vpop.permute.xlu0 %318
  %v320 = vsel %vm198, %v315, %v317
  %v321 = vsel %vm198, %v317, %v319
  %324 = vrot.lane.b32.xlu0 %v229, 95
  %v325 = vpop.permute.xlu0 %324
  %326 = vrot.lane.b32.xlu0 %v230, 95
  %v327 = vpop.permute.xlu0 %326
  %328 = vrot.lane.b32.xlu0 %v231, 95
  %v329 = vpop.permute.xlu0 %328
  %v330 = vsel %vm209, %v325, %v327
  %v331 = vsel %vm209, %v327, %v329
  %337 = vrot.lane.b32.xlu0 %v246, 94
  %v338 = vpop.permute.xlu0 %337
  %339 = vrot.lane.b32.xlu0 %v247, 94
  %v340 = vpop.permute.xlu0 %339
  %341 = vrot.lane.b32.xlu0 %v248, 94
  %v342 = vpop.permute.xlu0 %341
  %v343 = vsel %vm223, %v338, %v340
  %v344 = vsel %vm223, %v340, %v342
  %v347 = vld [vmem:[%s1] sm:$0xff]
  %v348 = vld [vmem:[%s2] sm:$0xff]
  %350 = vset.pattern.permute.xlu0 0
  %351 = vperm.xlu0 %350, %v348
  %v352 = vpop.permute.xlu0 %351
  %vm354 = vcmask 588800
  %v356 = vsel %vm354, %v347, 0
  %358 = vmatprep.subr.mxu0 %v57
  %359 = vmatpush1.msra.mxu0 %v56
  %360 = vmatprep.subr.mxu0 %v133
  %361 = vmatpush1.msra.mxu0 %v132
  %362 = vmatprep.subr.mxu0 %v147
  %363 = vmatpush1.msra.mxu0 %v146
  %364 = vmatprep.subr.mxu0 %v161
  %365 = vmatpush1.msra.mxu0 %v160
  %366 = vmatprep.subr.mxu0 %v172
  %367 = vmatpush1.msra.mxu0 %v171
  %368 = vmatprep.subr.mxu0 %v186
  %369 = vmatpush1.msra.mxu0 %v185
  %370 = vmatprep.subr.mxu0 %v200
  %371 = vmatpush1.msra.mxu0 %v199
  %372 = vmatprep.subr.mxu0 %v211
  %373 = vmatpush1.msra.mxu0 %v210
  %374 = vmatprep.subr.mxu0 %v225
  %375 = vmatpush1.msra.mxu0 %v224
  %376 = vmatprep.subr.mxu0 0.0
  %377 = vmatpush1.msra.mxu0 0.0
  %378 = vmatprep.subr.mxu0 0.0
  %379 = vmatpush1.msra.mxu0 0.0
  %380 = vmatprep.subr.mxu0 0.0
  %381 = vmatpush1.msra.mxu0 0.0
  %382 = vmatprep.subr.mxu0 0.0
  %383 = vmatpush1.msra.mxu0 0.0
  %384 = vmatprep.subr.mxu0 0.0
  %385 = vmatpush1.msra.mxu0 0.0
  %386 = vmatprep.subr.mxu0 0.0
  %387 = vmatpush1.msra.mxu0 0.0
  %388 = vmatprep.subr.mxu0 0.0
  %389 = vmatpush1.msra.mxu0 0.0
  %390 = vmatprep.subr.mxu0 0.0
  %391 = vmatpush1.msra.mxu0 0.0
  %392 = vmatprep.subr.mxu0 0.0
  %393 = vmatpush1.msra.mxu0 0.0
  %394 = vmatprep.subr.mxu0 0.0
  %395 = vmatpush1.msra.mxu0 0.0
  %396 = vmatprep.subr.mxu0 0.0
  %397 = vmatpush1.msra.mxu0 0.0
  %398 = vmatprep.subr.mxu0 0.0
  %399 = vmatpush1.msra.mxu0 0.0
  %400 = vmatprep.subr.mxu0 0.0
  %401 = vmatpush1.msra.mxu0 0.0
  %402 = vmatprep.subr.mxu0 0.0
  %403 = vmatpush1.msra.mxu0 0.0
  %404 = vmatprep.subr.mxu0 0.0
  %405 = vmatpush1.msra.mxu0 0.0
  %406 = vmatprep.subr.mxu0 0.0
  %407 = vmatpush1.msra.mxu0 0.0
  %408 = vmatprep.subr.mxu0 0.0
  %409 = vmatpush1.msra.mxu0 0.0
  %410 = vmatprep.subr.mxu0 0.0
  %411 = vmatpush1.msra.mxu0 0.0
  %412 = vmatprep.subr.mxu0 0.0
  %413 = vmatpush1.msra.mxu0 0.0
  %414 = vmatprep.subr.mxu0 0.0
  %415 = vmatpush1.msra.mxu0 0.0
  %416 = vmatprep.subr.mxu0 0.0
  %417 = vmatpush1.msra.mxu0 0.0
  %418 = vmatprep.subr.mxu0 0.0
  %419 = vmatpush1.msra.mxu0 0.0
  %420 = vmatprep.subr.mxu0 0.0
  %421 = vmatpush1.msra.mxu0 0.0
  %422 = vmatprep.mubr.f32.mxu0 0.0
  %423 = vmatmul.mubr.f32.gmra.mrb[0].mxu0 %v356
  %v424 = vpop.f32.mrb[0].mxu0
  %v425 = vadd.f32 %v352, %v424
  %v426 = vpop.f32.mrb[0].mxu0
  %v427 = vadd.f32 %v352, %v426
  %428 = vdwg.mxu0
  %429 = vmatprep.subr.mxu0 %v233
  %430 = vmatpush1.msra.mxu0 %v232
  %431 = vmatprep.subr.mxu0 %v259
  %432 = vmatpush1.msra.mxu0 %v258
  %433 = vmatprep.subr.mxu0 %v272
  %434 = vmatpush1.msra.mxu0 %v271
  %435 = vmatprep.subr.mxu0 %v285
  %436 = vmatpush1.msra.mxu0 %v284
  %437 = vmatprep.subr.mxu0 %v295
  %438 = vmatpush1.msra.mxu0 %v294
  %439 = vmatprep.subr.mxu0 %v308
  %440 = vmatpush1.msra.mxu0 %v307
  %441 = vmatprep.subr.mxu0 %v321
  %442 = vmatpush1.msra.mxu0 %v320
  %443 = vmatprep.subr.mxu0 %v331
  %444 = vmatpush1.msra.mxu0 %v330
  %445 = vmatprep.subr.mxu0 %v344
  %446 = vmatpush1.msra.mxu0 %v343
  %447 = vmatprep.subr.mxu0 0.0
  %448 = vmatpush1.msra.mxu0 0.0
  %449 = vmatprep.subr.mxu0 0.0
  %450 = vmatpush1.msra.mxu0 0.0
  %451 = vmatprep.subr.mxu0 0.0
  %452 = vmatpush1.msra.mxu0 0.0
  %453 = vmatprep.subr.mxu0 0.0
  %454 = vmatpush1.msra.mxu0 0.0
  %455 = vmatprep.subr.mxu0 0.0
  %456 = vmatpush1.msra.mxu0 0.0
  %457 = vmatprep.subr.mxu0 0.0
  %458 = vmatpush1.msra.mxu0 0.0
  %459 = vmatprep.subr.mxu0 0.0
  %460 = vmatpush1.msra.mxu0 0.0
  %461 = vmatprep.subr.mxu0 0.0
  %462 = vmatpush1.msra.mxu0 0.0
  %463 = vmatprep.subr.mxu0 0.0
  %464 = vmatpush1.msra.mxu0 0.0
  %465 = vmatprep.subr.mxu0 0.0
  %466 = vmatpush1.msra.mxu0 0.0
  %467 = vmatprep.subr.mxu0 0.0
  %468 = vmatpush1.msra.mxu0 0.0
  %469 = vmatprep.subr.mxu0 0.0
  %470 = vmatpush1.msra.mxu0 0.0
  %471 = vmatprep.subr.mxu0 0.0
  %472 = vmatpush1.msra.mxu0 0.0
  %473 = vmatprep.subr.mxu0 0.0
  %474 = vmatpush1.msra.mxu0 0.0
  %475 = vmatprep.subr.mxu0 0.0
  %476 = vmatpush1.msra.mxu0 0.0
  %477 = vmatprep.subr.mxu0 0.0
  %478 = vmatpush1.msra.mxu0 0.0
  %479 = vmatprep.subr.mxu0 0.0
  %480 = vmatpush1.msra.mxu0 0.0
  %481 = vmatprep.subr.mxu0 0.0
  %482 = vmatpush1.msra.mxu0 0.0
  %483 = vmatprep.subr.mxu0 0.0
  %484 = vmatpush1.msra.mxu0 0.0
  %485 = vmatprep.subr.mxu0 0.0
  %486 = vmatpush1.msra.mxu0 0.0
  %487 = vmatprep.subr.mxu0 0.0
  %488 = vmatpush1.msra.mxu0 0.0
  %489 = vmatprep.subr.mxu0 0.0
  %490 = vmatpush1.msra.mxu0 0.0
  %491 = vmatprep.subr.mxu0 0.0
  %492 = vmatpush1.msra.mxu0 0.0
  %493 = vmatprep.mubr.f32.mxu0 0.0
  %494 = vmatmul.mubr.f32.gmra.mrb[0].mxu0 %v356
  %v495 = vpop.f32.mrb[0].mxu0
  %v496 = vadd.f32 %v352, %v495
  %v497 = vpop.f32.mrb[0].mxu0
  %v498 = vadd.f32 %v352, %v497
  %499 = vdwg.mxu0
  %500 = vst [vmem:[%s3] sm:$0xff] %v425
  %501 = vst [vmem:[%s3 + $0x8] sm:$0xff] %v427
  %s502 = scalar_lea.vmem %s3, 16
  %503 = vst [vmem:[%s502] sm:$0xff] %v496
  %504 = vst [vmem:[%s502 + $0x8] sm:$0xff] %v498
  // Predicated region
  $region14: #{coordconv_pallas.1} parent=0 // pred_check
    _
  $region15: #{coordconv_pallas.1} parent=0 // pred_check_branch
    %506 = sbr.rel (0) target = $region17
  $region16: #{coordconv_pallas.1} parent=0 // pred_region
    _
  $region17: #{coordconv_pallas.1} parent=0 // pred_fallthru
    _
  // Predicated region
  $region18: #{coordconv_pallas.1} parent=0 // pred_check
    _
  $region19: #{coordconv_pallas.1} parent=0 // pred_check_branch
    %508 = sbr.rel (0) target = $region21
  $region20: #{coordconv_pallas.1} parent=0 // pred_region
    _
  $region21: #{coordconv_pallas.1} parent=0 // pred_fallthru
    _

</llo_original>
